<compile_context>
chip_gen: v6e
topology: v6e:2x2x1
jax: 0.10.0
libtpu: 0.0.40
codegen_flags: <defaults>
</compile_context>

<pallas_src>
import functools
import math

import jax
import jax.numpy as jnp
from jax import lax
from jax.experimental import pallas as pl
from jax.experimental.pallas import tpu as pltpu


def _round_up(x, m):
    return (x + m - 1) // m * m


def _label_smoothing_kl_kernel(tgt_ref, logp_ref, out_ref, *,
                               smoothing_value, confidence, entropy_const,
                               ignore_index):
    t = tgt_ref[...]                                  # (TN, 1) int32
    logp = logp_ref[...].astype(jnp.float32)          # (TN, V) log-probs

    col = lax.broadcasted_iota(jnp.int32, logp.shape, 1)
    is_t = col == t
    is_ig = col == ignore_index

    # Per-element weight of the smoothed target distribution:
    #   confidence at the target column, 0 at the ignore column, smoothing elsewhere.
    w = jnp.where(is_t, confidence, jnp.where(is_ig, 0.0, smoothing_value))
    cross = jnp.sum(logp * w, axis=1, keepdims=True)  # (TN, 1)  sum_j w_j * logp_j

    # kl_div(logp, prob, 'sum') per row = sum_j prob_j*log(prob_j) - sum_j prob_j*logp_j
    # The entropy term is a compile-time constant for every non-ignored row.
    row_loss = jnp.where(t == ignore_index, 0.0, entropy_const - cross)

    # One f32 partial per tile; broadcast to a lane-dense block (unmasked store).
    partial = jnp.sum(row_loss)
    out_ref[...] = jnp.full(out_ref.shape, partial, dtype=out_ref.dtype)


def label_smoothing_loss(output, target, *, label_smoothing, tgt_vocab_size,
                         ignore_index=1, target_block_bytes=4 << 20):
    """output: (N, V) float log-probs; target: (N,) int. Returns scalar f32."""
    n, v = output.shape
    assert v == tgt_vocab_size
    assert tgt_vocab_size > 2, "label smoothing assumes vocab size > 2"
    smoothing_value = label_smoothing / (tgt_vocab_size - 2)
    confidence = 1.0 - label_smoothing

    # sum_j prob_j * log(prob_j) for a valid row, hoisted to a Python constant
    # (xlogy-style guards so label_smoothing in {0, 1} stays finite).
    entropy_const = 0.0
    if confidence > 0.0:
        entropy_const += confidence * math.log(confidence)
    if smoothing_value > 0.0:
        entropy_const += (tgt_vocab_size - 2) * smoothing_value * math.log(smoothing_value)

    # Row tile: ~4 MiB of f32 log-probs per block (multiple of 8 rows), so the
    # double-buffered input (~8 MiB) fits every generation's scoped VMEM while
    # amortizing per-grid-step overhead.
    rows_per_block = max(8, (target_block_bytes // (4 * v)) // 8 * 8)
    tile_n = min(rows_per_block, _round_up(n, 8))
    n_pad = _round_up(n, tile_n)
    num_tiles = n_pad // tile_n

    logp = output.astype(jnp.float32)
    tgt = target.astype(jnp.int32)
    if n_pad != n:
        # Padded rows get target == ignore_index -> exactly zero contribution.
        logp = jnp.pad(logp, ((0, n_pad - n), (0, 0)))
        tgt = jnp.pad(tgt, (0, n_pad - n), constant_values=ignore_index)
    target2d = tgt.reshape(n_pad, 1)

    kernel = functools.partial(
        _label_smoothing_kl_kernel,
        smoothing_value=float(smoothing_value),
        confidence=float(confidence),
        entropy_const=float(entropy_const),
        ignore_index=int(ignore_index),
    )

    partials = pl.pallas_call(
        kernel,
        out_shape=jax.ShapeDtypeStruct((num_tiles, 8, 128), jnp.float32),
        grid_spec=pltpu.PrefetchScalarGridSpec(
            num_scalar_prefetch=0,
            grid=(num_tiles,),
            in_specs=[
                pl.BlockSpec((tile_n, 1), lambda i: (i, 0)),
                pl.BlockSpec((tile_n, v), lambda i: (i, 0)),
            ],
            out_specs=pl.BlockSpec((1, 8, 128), lambda i: (i, 0, 0)),
        ),
        compiler_params=pltpu.CompilerParams(
            dimension_semantics=("parallel",),
            vmem_limit_bytes=32 * 1024 * 1024,
        ),
    )(target2d, logp)

    # One partial per tile -> final tiny reduce in plain JAX (better accuracy
    # than a serialized in-kernel scalar accumulator).
    return jnp.sum(partials[:, 0, 0])


def _reference(output, target, *, label_smoothing, tgt_vocab_size, ignore_index=1):
    n, v = output.shape
    smoothing_value = label_smoothing / (tgt_vocab_size - 2)
    confidence = 1.0 - label_smoothing
    col = jnp.arange(v)[None, :]
    t = target[:, None]
    prob = jnp.full((n, v), smoothing_value, jnp.float32)
    prob = jnp.where(col == ignore_index, 0.0, prob)
    prob = jnp.where(col == t, confidence, prob)
    prob = jnp.where(t == ignore_index, 0.0, prob)
    contrib = jnp.where(prob > 0.0, prob * (jnp.log(prob) - output), 0.0)
    return jnp.sum(contrib)


if __name__ == "__main__":
    # Deterministic synthetic inputs (no checkpoint loading).
    label_smoothing = 0.1
    tgt_vocab_size = 32
    ignore_index = 1
    N, V = 20, tgt_vocab_size        # N not a multiple of 8 -> exercises padding

    key = jax.random.PRNGKey(0)
    k_logits, k_tgt = jax.random.split(key)
    logits = jax.random.normal(k_logits, (N, V), dtype=jnp.float32)
    output = jax.nn.log_softmax(logits, axis=-1)          # kl_div expects log-probs
    target = jax.random.randint(k_tgt, (N,), 0, V, dtype=jnp.int32)
    # Make sure a few targets hit the ignore_index to exercise the row mask.
    target = target.at[0].set(ignore_index).at[5].set(ignore_index)

    loss = label_smoothing_loss(
        output, target,
        label_smoothing=label_smoothing,
        tgt_vocab_size=tgt_vocab_size,
        ignore_index=ignore_index,
    )
    loss = jax.block_until_ready(loss)

    ref = _reference(output, target,
                     label_smoothing=label_smoothing,
                     tgt_vocab_size=tgt_vocab_size,
                     ignore_index=ignore_index)
    assert jnp.allclose(loss, ref, rtol=1e-5, atol=1e-5), (loss, ref)

    print("KERNEL_OK")
</pallas_src>

<mosaic_0001>
module attributes {stable_mosaic.version = 11 : i64} {
  func.func @_label_smoothing_kl_kernel(%arg0: i32, %arg1: memref<24x1xi32, #tpu.memory_space<vmem>>, %arg2: memref<24x32xf32, #tpu.memory_space<vmem>>, %arg3: memref<1x8x128xf32, #tpu.memory_space<vmem>>) attributes {dimension_semantics = [#tpu.dimension_semantics<parallel>], iteration_bounds = array<i64: 1>, scalar_prefetch = 0 : i64, scratch_operands = 0 : i64, tpu.core_type = #tpu.core_type<tc>, window_params = [{transform_indices = @transform_0, window_bounds = array<i64: 24, 1>}, {transform_indices = @transform_1, window_bounds = array<i64: 24, 32>}, {transform_indices = @transform_2, window_bounds = array<i64: 1, 8, 128>}]} {
    %c0 = arith.constant 0 : index
    %c0_0 = arith.constant 0 : index
    %0 = vector.load %arg1[%c0, %c0_0] : memref<24x1xi32, #tpu.memory_space<vmem>>, vector<24x1xi32>
    %c0_1 = arith.constant 0 : index
    %c0_2 = arith.constant 0 : index
    %1 = vector.load %arg2[%c0_1, %c0_2] : memref<24x32xf32, #tpu.memory_space<vmem>>, vector<24x32xf32>
    %2 = tpu.iota {dimensions = array<i32: 1>} : vector<24x32xi32>
    %3 = vector.broadcast %0 : vector<24x1xi32> to vector<24x32xi32>
    %4 = arith.cmpi eq, %2, %3 : vector<24x32xi32>
    %c1_i32 = arith.constant 1 : i32
    %5 = vector.broadcast %c1_i32 : i32 to vector<24x32xi32>
    %6 = arith.cmpi eq, %2, %5 : vector<24x32xi32>
    %cst = arith.constant 0.000000e+00 : f32
    %cst_3 = arith.constant 0.00333333341 : f32
    %7 = vector.broadcast %cst : f32 to vector<24x32xf32>
    %8 = vector.broadcast %cst_3 : f32 to vector<24x32xf32>
    %9 = arith.select %6, %7, %8 : vector<24x32xi1>, vector<24x32xf32>
    %cst_4 = arith.constant 0.899999976 : f32
    %10 = vector.broadcast %cst_4 : f32 to vector<24x32xf32>
    %11 = arith.select %4, %10, %9 : vector<24x32xi1>, vector<24x32xf32>
    %12 = arith.mulf %1, %11 : vector<24x32xf32>
    %cst_5 = arith.constant dense<0.000000e+00> : vector<24xf32>
    %13 = vector.multi_reduction <add>, %12, %cst_5 [1] : vector<24x32xf32> to vector<24xf32>
    %14 = vector.shape_cast %13 : vector<24xf32> to vector<24x1xf32>
    %c1_i32_6 = arith.constant 1 : i32
    %15 = vector.broadcast %c1_i32_6 : i32 to vector<24x1xi32>
    %16 = arith.cmpi eq, %0, %15 : vector<24x1xi32>
    %cst_7 = arith.constant -0.665202737 : f32
    %17 = vector.broadcast %cst_7 : f32 to vector<24x1xf32>
    %18 = arith.subf %17, %14 : vector<24x1xf32>
    %cst_8 = arith.constant 0.000000e+00 : f32
    %19 = vector.broadcast %cst_8 : f32 to vector<24x1xf32>
    %20 = arith.select %16, %19, %18 : vector<24x1xi1>, vector<24x1xf32>
    %21 = vector.shape_cast %20 : vector<24x1xf32> to vector<1x24x1xf32>
    %cst_9 = arith.constant dense<0.000000e+00> : vector<1xf32>
    %22 = vector.multi_reduction <add>, %21, %cst_9 [1, 2] : vector<1x24x1xf32> to vector<1xf32>
    %23 = vector.shape_cast %22 : vector<1xf32> to vector<1x1x1xf32>
    %24 = vector.extract %23[0, 0, 0] : f32 from vector<1x1x1xf32>
    %25 = vector.broadcast %24 : f32 to vector<1x8x128xf32>
    %c0_10 = arith.constant 0 : index
    %c0_11 = arith.constant 0 : index
    %c0_12 = arith.constant 0 : index
    %26 = vector.load %arg3[%c0_10, %c0_11, %c0_12] : memref<1x8x128xf32, #tpu.memory_space<vmem>>, vector<1x8x128xf32>
    tpu.vector_store %arg3[%c0_10, %c0_11, %c0_12], %25 {strides = array<i32>} : memref<1x8x128xf32, #tpu.memory_space<vmem>>, vector<1x8x128xf32>,
    return
  }
  func.func @transform_0(%arg0: i32) -> (i32, i32) {
    %c0_i32 = arith.constant 0 : i32
    %c0_i32_0 = arith.constant 0 : i32
    return %arg0, %c0_i32 : i32, i32
  }
  func.func @transform_1(%arg0: i32) -> (i32, i32) {
    %c0_i32 = arith.constant 0 : i32
    %c0_i32_0 = arith.constant 0 : i32
    return %arg0, %c0_i32 : i32, i32
  }
  func.func @transform_2(%arg0: i32) -> (i32, i32, i32) {
    %c0_i32 = arith.constant 0 : i32
    %c0_i32_0 = arith.constant 0 : i32
    %c0_i32_1 = arith.constant 0 : i32
    return %arg0, %c0_i32, %c0_i32_0 : i32, i32, i32
  }
}

</mosaic_0001>

<llo_original>
// kernel: tpu_custom_call.1
$region0: #{tpu_custom_call.1}
  #allocation0 [shape = 'u32[]', space=smem, size = 0x4, offset = 0x4, fixed_abs, tag = 'smem constant byte address 0x4 - core index']
  #allocation1 [shape = 'u32[144,128]{1,0:T(1,128)}', space=vmem, size = 0x12000, scoped, tag = 'internal scratch']
  %s0 = inlined_call_operand.vmem [shape: s32[24,1], index: 0, kind: input, shape index: {}]
  %s1 = inlined_call_operand.vmem [shape: f32[24,32], index: 1, kind: input, shape index: {}]
  %s2 = inlined_call_operand.hbm [shape: f32[1,8,128], index: 2, kind: output, shape index: {}]
  %s3 = sld [smem:[#allocation0]]
  $region18: #{tpu_custom_call.1} parent=0
    _
  %s5 = ssub.s32 1, %s3
  %s6 = scalar_select 0, %s5, %s3
  $region1: #{tpu_custom_call.1} parent=0
    #allocation2 [shape = 'u8[4096]{0}', space=vmem, size = 0x1000, scoped, tag = 'output window, operand 0, single buffered']
    #allocation3 [shape = 's32[1]{0}', space=sflag, size = 0x4, scoped, tag = 'scoped memory for tpu_custom_call.1']
    %7 = vsyncpa [#allocation3], 0
    // Predicated region
    $region2: #{tpu_custom_call.1} parent=1 // pred_check
      _
    $region3: #{tpu_custom_call.1} parent=1 // pred_check_branch
      %9 = sbr.rel (0) target = $region5
    $region4: #{tpu_custom_call.1} parent=1 // pred_region
      _
    $region5: #{tpu_custom_call.1} parent=1 // pred_fallthru
      _
    // Predicated region
    $region6: #{tpu_custom_call.1} parent=1 // pred_check
      _
    $region7: #{tpu_custom_call.1} parent=1 // pred_check_branch
      %11 = sbr.rel (0) target = $region9
    $region8: #{tpu_custom_call.1} parent=1 // pred_region
      _
    $region9: #{tpu_custom_call.1} parent=1 // pred_fallthru
      _
    %v12 = vld [vmem:[%s0] sm:$0xff]
    %v13 = vld [vmem:[%s0 + $0x8] sm:$0xff]
    %v14 = vld [vmem:[%s0 + $0x10] sm:$0xff]
    %v15 = vld [vmem:[%s1] sm:$0xff]
    %v16 = vld [vmem:[%s1 + $0x8] sm:$0xff]
    %v17 = vld [vmem:[%s1 + $0x10] sm:$0xff]
    %v18 = vlaneseq
    %v19 = vand.u32 %v18, 127
    %20 = vset.pattern.permute.xlu0 0
    %21 = vperm.xlu0 %20, %v12
    %v22 = vpop.permute.xlu0 %21
    %23 = vset.pattern.permute.xlu0 0
    %24 = vperm.xlu0 %23, %v13
    %v25 = vpop.permute.xlu0 %24
    %26 = vset.pattern.permute.xlu0 0
    %27 = vperm.xlu0 %26, %v14
    %v28 = vpop.permute.xlu0 %27
    %vm29 = vcmp.eq.s32.totalorder %v19, %v22
    %vm30 = vcmp.eq.s32.totalorder %v19, %v25
    %vm31 = vcmp.eq.s32.totalorder %v19, %v28
    %vm32 = vcmp.eq.s32.totalorder %v19, 1
    %v33 = vsel %vm32, 0.0, 0.0033333334
    %v34 = vsel %vm29, 0.9, %v33
    %v35 = vsel %vm30, 0.9, %v33
    %v36 = vsel %vm31, 0.9, %v33
    %v37 = vmul.f32 %v15, %v34
    %v38 = vmul.f32 %v16, %v35
    %v39 = vmul.f32 %v17, %v36
    %vm40 = vcmask 261120
    %v41 = vsel %vm40, %v37, 0.0
    %42 = vadd.xlane.f32.xlu0 %v41
    %v43 = vpop.xlane.xlu0 %42
    %v44 = vsel %vm40, %v38, 0.0
    %45 = vadd.xlane.f32.xlu0 %v44
    %v46 = vpop.xlane.xlu0 %45
    %v47 = vsel %vm40, %v39, 0.0
    %48 = vadd.xlane.f32.xlu0 %v47
    %v49 = vpop.xlane.xlu0 %48
    %vm50 = vcmp.eq.s32.totalorder %v12, 1
    %vm51 = vcmp.eq.s32.totalorder %v13, 1
    %vm52 = vcmp.eq.s32.totalorder %v14, 1
    %v53 = vsub.f32 -0.66520274, %v43
    %v54 = vsub.f32 -0.66520274, %v46
    %v55 = vsub.f32 -0.66520274, %v49
    %v56 = vsel %vm50, 0.0, %v53
    %v57 = vsel %vm51, 0.0, %v54
    %v58 = vsel %vm52, 0.0, %v55
    %vm59 = vcmask 7168
    %v60 = vsel %vm59, %v56, 0.0
    %v61 = vsel %vm59, %v57, 0.0
    %v62 = vadd.f32 %v60, %v61
    %v63 = vsel %vm59, %v58, 0.0
    %v64 = vadd.f32 %v62, %v63
    %65 = vadd.xlane.f32.xlu0 %v64
    %v66 = vpop.xlane.xlu0 %65
    %v67 = vrot.slane %v66, 4
    %v68 = vadd.f32 %v66, %v67
    %v69 = vrot.slane %v68, 2
    %v70 = vadd.f32 %v68, %v69
    %v71 = vrot.slane %v70, 1
    %v72 = vadd.f32 %v70, %v71
    %s73 = vtos %v72
    %v74 = vstv %s73
    %75 = vst [vmem:[#allocation2] sm:$0xff] %v74
    // Predicated region
    $region10: #{tpu_custom_call.1} parent=1 // pred_check
      _
    $region11: #{tpu_custom_call.1} parent=1 // pred_check_branch
      %77 = sbr.rel (0) target = $region13
    $region12: #{tpu_custom_call.1} parent=1 // pred_region
      %s79 = ssub.s32 128, 128
      %80 = vsyncadd [#allocation3], %s79
      %s82 = sshll.u32 [#allocation2], 4
      %s83 = int_to_ptr.vmem [resolvable:$true] %s82
      %85 = dma.vmem_to_hbm [thread:$0]  %s83, 128, %s2, [#allocation3]
    $region13: #{tpu_custom_call.1} parent=1 // pred_fallthru
      _
    // Predicated region
    $region14: #{tpu_custom_call.1} parent=1 // pred_check
      _
    $region15: #{tpu_custom_call.1} parent=1 // pred_check_branch
      %87 = sbr.rel (0) target = $region17
    $region16: #{tpu_custom_call.1} parent=1 // pred_region
      %88 = dma.done [#allocation3], 128
    $region17: #{tpu_custom_call.1} parent=1 // pred_fallthru
      _
    %89 = vsyncpa [#allocation3], 1

</llo_original>
